<compile_context>
chip_gen: v5e
topology: v5e:2x2
jax: 0.10.0
libtpu: 0.0.40
codegen_flags: <defaults>
</compile_context>

<pallas_src>
import jax
import jax.numpy as jnp
from jax import lax
from jax.experimental import pallas as pl
from jax.experimental.pallas import tpu as pltpu


_DEFAULT_VMEM_CAP = 64 * 1024 * 1024   # v7x per-TensorCore VMEM (most restrictive)


def _vmem_capacity_bytes():
    try:
        return int(pltpu.get_tpu_info().vmem_capacity_bytes)
    except Exception:
        return _DEFAULT_VMEM_CAP


def _round_up(x, m):
    return ((x + m - 1) // m) * m


# ----------------------------------------------------------------------------
# Shared in-kernel helper: (C, 1) f32 channel means -> (C, 1) f32 scale.
# ----------------------------------------------------------------------------
def _fc_hardsigmoid(pooled_c1, w_ref, b_ref):
    """z = W @ pooled + b ; hardsigmoid(z).  Returns an f32 (C, 1) column.

    Implemented as broadcast-multiply + lane reduction (one tiny transpose of
    the (C,1) pooled column, no tiny-MXU matmul): robust to lower and cheap
    for any C, and the result is already the column layout the rescale needs.
    """
    pooled_row = jnp.transpose(pooled_c1)                            # (1, C_in)
    z = jnp.sum(w_ref[...].astype(jnp.float32) * pooled_row,
                axis=1, keepdims=True)                               # (C_out, 1)
    z = z + b_ref[...].astype(jnp.float32)
    return jnp.clip((z + 3.0) * (1.0 / 6.0), 0.0, 1.0)               # hardsigmoid


# ----------------------------------------------------------------------------
# Path A: single-read/single-write slab path (manual DMA, in-place rescale).
# ----------------------------------------------------------------------------
def _lane_chunks(hw, c, itemsize, *, force_lanes=None, max_chunks=16,
                 target_bytes=4 << 20):
    """Static (start, size) lane chunks used inside the slab kernel.

    Chunking bounds the size of in-kernel vector values and lets the in-DMAs
    overlap pooling / the out-DMAs overlap the rescale.  Chunks are 128-lane
    aligned except for a static ragged tail.
    """
    if force_lanes is not None:
        lanes = max(1, int(force_lanes))
    else:
        per_chunk = max(target_bytes, -(-(c * hw * itemsize) // max_chunks))
        lanes = max(128, (per_chunk // (c * itemsize)) // 128 * 128)
    lanes = min(lanes, hw)
    return [(s, min(lanes, hw - s)) for s in range(0, hw, lanes)]


def _make_slab_kernel(hw, chunks, out_dtype):
    inv_hw = 1.0 / float(hw)

    def kernel(x_hbm, w_ref, b_ref, o_hbm, slab, in_sem, out_sem):
        n = pl.program_id(0)

        # ---- Stream x[n] into the slab chunk by chunk; the pooling of chunk
        # ---- i overlaps the in-flight DMAs of chunks i+1.. (all chunks are
        # ---- queued up front, one semaphore per chunk).
        in_cps = []
        for idx, (s, sz) in enumerate(chunks):
            cp = pltpu.make_async_copy(
                x_hbm.at[n, :, pl.ds(s, sz)],
                slab.at[:, pl.ds(s, sz)],
                in_sem.at[idx])
            cp.start()
            in_cps.append(cp)

        pooled = jnp.zeros((slab.shape[0], 1), jnp.float32)
        for idx, (s, sz) in enumerate(chunks):
            in_cps[idx].wait()
            pooled = pooled + jnp.sum(slab[:, pl.ds(s, sz)], axis=-1,
                                      keepdims=True, dtype=jnp.float32)
        pooled = pooled * inv_hw                                     # (C, 1) f32

        # ---- Tiny FC + hardsigmoid; scale kept in f32 so the rescale runs
        # ---- the multiply at f32 and only the product is cast.
        scale = _fc_hardsigmoid(pooled, w_ref, b_ref)                # (C, 1) f32

        # ---- Rescale in place chunk by chunk and stream each chunk's
        # ---- writeback so the out-DMA overlaps rescaling the next chunk.
        # ---- (The (C,1) scale lane-broadcast is fused into the multiply per
        # ---- chunk; the chunk count is small & static, so nothing to hoist.)
        out_cps = []
        for idx, (s, sz) in enumerate(chunks):
            xc = slab[:, pl.ds(s, sz)]
            slab[:, pl.ds(s, sz)] = (xc * scale).astype(out_dtype)
            cp = pltpu.make_async_copy(
                slab.at[:, pl.ds(s, sz)],
                o_hbm.at[n, :, pl.ds(s, sz)],
                out_sem.at[idx])
            cp.start()
            out_cps.append(cp)
        for cp in out_cps:
            cp.wait()

    return kernel


# ----------------------------------------------------------------------------
# Path B: two auto-pipelined calls (pool+FC, then fully-parallel rescale).
# ----------------------------------------------------------------------------
def _pick_hw_tile(hw, c, itemsize, budget):
    """Large, 128-lane-aligned tile. ~4 MiB per (C, tile) buffer; four such
    buffers are live at once in the rescale call (double-buffered in + out)."""
    by_target = (4 << 20) // (c * itemsize)
    by_budget = max(128, (budget // 2) // (4 * c * itemsize))
    lanes = max(512, min(by_target, by_budget))
    lanes = max(128, (lanes // 128) * 128)
    return min(lanes, _round_up(hw, 128))


def _make_pool_scale_kernel(hw, tile, num_tiles):
    inv_hw = 1.0 / float(hw)
    ragged = (hw % tile) != 0

    def kernel(x_ref, w_ref, b_ref, scale_ref, acc_ref):
        j = pl.program_id(1)

        @pl.when(j == 0)
        def _():
            acc_ref[...] = jnp.zeros_like(acc_ref)

        xt = x_ref[0]                                                # (C, tile)
        if ragged:
            lane = lax.broadcasted_iota(jnp.int32, xt.shape, 1) + j * tile
            xt = jnp.where(lane < hw, xt, jnp.zeros_like(xt))
        acc_ref[...] += jnp.sum(xt, axis=-1, keepdims=True, dtype=jnp.float32)

        @pl.when(j == num_tiles - 1)
        def _():
            scale_ref[0] = _fc_hardsigmoid(acc_ref[...] * inv_hw, w_ref, b_ref)

    return kernel


def _rescale_kernel(x_ref, s_ref, o_ref):
    # x_ref/o_ref: (1, C, tile); s_ref: (1, C, 1) f32 -> f32 multiply, cast once.
    o_ref[...] = (x_ref[...] * s_ref[0]).astype(o_ref.dtype)


# ----------------------------------------------------------------------------
# Wrapper: path selection, VMEM budgeting, pallas_call plumbing.
# ----------------------------------------------------------------------------
def channel_attention(x, fc_weight, fc_bias, *, hw_tile=None,
                      slab_chunk_lanes=None):
    """Pallas TPU ChannelAttention forward.

    x: (N, C, H, W); fc_weight: (C, C, 1, 1) (or (C, C)); fc_bias: (C,).
    hw_tile: force the two-pass (pool + rescale) path with this lane tile
      (should be a multiple of 128).  Default: chosen automatically only when
      the (C, H*W) slab does not fit in VMEM.
    slab_chunk_lanes: override the in-kernel lane chunking of the slab path
      (testing / tuning only).
    """
    n, c, h, w = x.shape
    hw = h * w
    itemsize = jnp.dtype(x.dtype).itemsize
    slab_bytes = c * hw * itemsize

    x_flat = x.reshape(n, c, hw)
    w_mat = fc_weight.reshape(c, c)            # (C_out, C_in)
    b_col = fc_bias.reshape(c, 1)
    # Double-buffered tiny parameter blocks.
    param_bytes = 2 * (w_mat.size * jnp.dtype(w_mat.dtype).itemsize
                       + b_col.size * jnp.dtype(b_col.dtype).itemsize)

    vmem_cap = _vmem_capacity_bytes()
    usable = int(vmem_cap * 0.9)               # review: use ~0.85-0.9 of VMEM
    flops = int(n * (2 * c * hw + 2 * c * c))

    chunks = _lane_chunks(hw, c, itemsize, force_lanes=slab_chunk_lanes)
    max_chunk_lanes = max(sz for _, sz in chunks)
    # One resident slab (in-place rescale) + params + f32 compute temporaries.
    slab_need = (slab_bytes + param_bytes
                 + 2 * max_chunk_lanes * c * 4 + (4 << 20))

    use_slab_path = hw_tile is None and slab_need <= usable

    if use_slab_path:
        # -------- Path A: 1 HBM read + 1 HBM write of x, fully fused. --------
        kernel = _make_slab_kernel(hw, chunks, x.dtype)
        num_chunks = len(chunks)
        grid_spec = pltpu.PrefetchScalarGridSpec(
            num_scalar_prefetch=0,
            grid=(n,),
            in_specs=[
                pl.BlockSpec(memory_space=pl.ANY),                 # x in HBM
                pl.BlockSpec((c, c), lambda i: (0, 0)),
                pl.BlockSpec((c, 1), lambda i: (0, 0)),
            ],
            out_specs=pl.BlockSpec(memory_space=pl.ANY),           # DMA'd out
            scratch_shapes=[
                pltpu.VMEM((c, hw), x.dtype),                      # single slab
                pltpu.SemaphoreType.DMA((num_chunks,)),            # in-copy sems
                pltpu.SemaphoreType.DMA((num_chunks,)),            # out-copy sems
            ])
        out_flat = pl.pallas_call(
            kernel,
            out_shape=jax.ShapeDtypeStruct((n, c, hw), x.dtype),
            grid_spec=grid_spec,
            compiler_params=pltpu.CompilerParams(
                # Each grid step is fully self-contained (no cross-step DMA
                # state), so the batch axis can be split across TensorCores.
                dimension_semantics=("parallel",),
                vmem_limit_bytes=int(min(max(slab_need, 32 << 20),
                                         int(vmem_cap * 0.95)))),
            cost_estimate=pl.CostEstimate(
                flops=flops, transcendentals=0,
                bytes_accessed=int(2 * n * slab_bytes + param_bytes)),
            # Pure per-element rescale of x: every region of x is fully read
            # (DMA'd into the slab) before its aliased region is written.
            input_output_aliases={0: 0},
        )(x_flat, w_mat, b_col)
        return out_flat.reshape(n, c, h, w)

    # ------------ Path B: two-pass, auto-pipelined, lane-aligned tiles ------
    tile = int(hw_tile) if hw_tile is not None else _pick_hw_tile(
        hw, c, itemsize, usable)
    num_tiles = pl.cdiv(hw, tile)

    # B1: global average pool + FC + hardsigmoid -> (N, C, 1) f32 scale.
    pool_vmem = 2 * c * tile * itemsize + param_bytes + (4 << 20)
    scale = pl.pallas_call(
        _make_pool_scale_kernel(hw, tile, num_tiles),
        out_shape=jax.ShapeDtypeStruct((n, c, 1), jnp.float32),
        grid_spec=pltpu.PrefetchScalarGridSpec(
            num_scalar_prefetch=0,
            grid=(n, num_tiles),
            in_specs=[
                pl.BlockSpec((1, c, tile), lambda i, j: (i, 0, j)),
                pl.BlockSpec((c, c), lambda i, j: (0, 0)),
                pl.BlockSpec((c, 1), lambda i, j: (0, 0)),
            ],
            out_specs=pl.BlockSpec((1, c, 1), lambda i, j: (i, 0, 0)),
            scratch_shapes=[pltpu.VMEM((c, 1), jnp.float32)]),
        compiler_params=pltpu.CompilerParams(
            dimension_semantics=("parallel", "arbitrary"),
            vmem_limit_bytes=int(min(max(pool_vmem, 32 << 20),
                                     int(vmem_cap * 0.95)))),
        cost_estimate=pl.CostEstimate(
            flops=int(n * (c * hw + 2 * c * c)), transcendentals=0,
            bytes_accessed=int(n * slab_bytes + param_bytes)),
    )(x_flat, w_mat, b_col)

    # B2: fully parallel rescale (both grid axes "parallel": even for N == 1
    # the HW tiles split across v7x's two TensorCores).
    rescale_vmem = 4 * c * tile * itemsize + (4 << 20)
    out_flat = pl.pallas_call(
        _rescale_kernel,
        out_shape=jax.ShapeDtypeStruct((n, c, hw), x.dtype),
        grid_spec=pltpu.PrefetchScalarGridSpec(
            num_scalar_prefetch=0,
            grid=(n, num_tiles),
            in_specs=[
                pl.BlockSpec((1, c, tile), lambda i, j: (i, 0, j)),
                pl.BlockSpec((1, c, 1), lambda i, j: (i, 0, 0)),
            ],
            out_specs=pl.BlockSpec((1, c, tile), lambda i, j: (i, 0, j))),
        compiler_params=pltpu.CompilerParams(
            dimension_semantics=("parallel", "parallel"),
            vmem_limit_bytes=int(min(max(rescale_vmem, 32 << 20),
                                     int(vmem_cap * 0.95)))),
        cost_estimate=pl.CostEstimate(
            flops=int(n * c * hw), transcendentals=0,
            bytes_accessed=int(2 * n * slab_bytes)),
        input_output_aliases={0: 0},
    )(x_flat, scale)
    return out_flat.reshape(n, c, h, w)


# ----------------------------------------------------------------------------
# Pure-JAX reference.
# ----------------------------------------------------------------------------
def _reference(x, fc_weight, fc_bias):
    pooled = jnp.mean(x, axis=(2, 3), keepdims=True)                 # (N, C, 1, 1)
    wmat = fc_weight.reshape(fc_weight.shape[0], fc_weight.shape[1])
    z = jnp.einsum("oc,ncij->noij", wmat, pooled) + fc_bias[None, :, None, None]
    attn = jnp.clip((z + 3.0) / 6.0, 0.0, 1.0)
    return x * attn


if __name__ == "__main__":
    key = jax.random.PRNGKey(0)
    ks = jax.random.split(key, 9)

    # --- Test 1: small f32 problem, single-pass slab path (auto-selected). ---
    N, C, H, W = 2, 4, 16, 16
    x = jax.random.normal(ks[0], (N, C, H, W), dtype=jnp.float32)
    fc_w = jax.random.normal(ks[1], (C, C, 1, 1), dtype=jnp.float32) * 0.5
    fc_b = jax.random.normal(ks[2], (C,), dtype=jnp.float32) * 0.1
    ref = _reference(x, fc_w, fc_b)
    out = jax.block_until_ready(channel_attention(x, fc_w, fc_b))
    assert out.shape == (N, C, H, W)
    assert jnp.allclose(out, ref, atol=1e-5, rtol=1e-5), "slab path mismatch"

    # --- Test 2: same problem, forced multi-chunk streaming inside the slab
    # --- path (exercises chunked pooling + streamed writeback DMAs).
    out_chunked = jax.block_until_ready(
        channel_attention(x, fc_w, fc_b, slab_chunk_lanes=128))
    assert jnp.allclose(out_chunked, ref, atol=1e-5, rtol=1e-5), \
        "chunked slab path mismatch"

    # --- Test 3: ragged spatial size (H*W = 400 = 3*128 + 16). ---
    N3, C3, H3, W3 = 2, 8, 20, 20
    x3 = jax.random.normal(ks[3], (N3, C3, H3, W3), dtype=jnp.float32)
    w3 = jax.random.normal(ks[4], (C3, C3, 1, 1), dtype=jnp.float32) * 0.3
    b3 = jax.random.normal(ks[5], (C3,), dtype=jnp.float32) * 0.1
    ref3 = _reference(x3, w3, b3)
    # Forced two-pass path: masked pooling + masked lane stores on the tail.
    out3 = jax.block_until_ready(channel_attention(x3, w3, b3, hw_tile=128))
    assert jnp.allclose(out3, ref3, atol=1e-5, rtol=1e-5), "two-pass path mismatch"
    # Ragged static tail inside the slab path's chunking.
    out3b = jax.block_until_ready(
        channel_attention(x3, w3, b3, slab_chunk_lanes=128))
    assert jnp.allclose(out3b, ref3, atol=1e-5, rtol=1e-5), \
        "slab path ragged-tail mismatch"

    # --- Test 4: bf16 activations / weights, wider channel count. ---
    N4, C4, H4, W4 = 2, 32, 8, 16
    x4 = jax.random.normal(ks[6], (N4, C4, H4, W4), dtype=jnp.float32)
    w4 = jax.random.normal(ks[7], (C4, C4, 1, 1), dtype=jnp.float32) * 0.3
    b4 = jax.random.normal(ks[8], (C4,), dtype=jnp.float32) * 0.1
    x4b, w4b, b4b = (a.astype(jnp.bfloat16) for a in (x4, w4, b4))
    ref4 = _reference(x4b.astype(jnp.float32), w4b.astype(jnp.float32),
                      b4b.astype(jnp.float32))
    out4 = jax.block_until_ready(channel_attention(x4b, w4b, b4b))
    assert jnp.allclose(out4.astype(jnp.float32), ref4,
                        atol=3e-2, rtol=3e-2), "bf16 path mismatch"

    print("KERNEL_OK")
</pallas_src>

<mosaic_0001>
module attributes {stable_mosaic.version = 11 : i64} {
  func.func @kernel(%arg0: i32, %arg1: memref<2x4x256xf32, #tpu.memory_space<any>>, %arg2: memref<4x4xf32, #tpu.memory_space<vmem>>, %arg3: memref<4x1xf32, #tpu.memory_space<vmem>>, %arg4: memref<2x4x256xf32, #tpu.memory_space<any>>, %arg5: memref<4x256xf32, #tpu.memory_space<vmem>>, %arg6: memref<1x!tpu.dma_semaphore, #tpu.memory_space<semaphore_mem>>, %arg7: memref<1x!tpu.dma_semaphore, #tpu.memory_space<semaphore_mem>>) attributes {dimension_semantics = [#tpu.dimension_semantics<parallel>], iteration_bounds = array<i64: 2>, scalar_prefetch = 0 : i64, scratch_operands = 3 : i64, tpu.core_type = #tpu.core_type<tc>, window_params = [{}, {pipeline_mode = #tpu.pipeline_mode<synchronous>, transform_indices = @transform_1, window_bounds = array<i64: 4, 4>}, {pipeline_mode = #tpu.pipeline_mode<synchronous>, transform_indices = @transform_2, window_bounds = array<i64: 4, 1>}, {}]} {
    %c0_i32 = arith.constant 0 : i32
    %c0_i32_0 = arith.constant 0 : i32
    %c0_i32_1 = arith.constant 0 : i32
    %0 = tpu.memref_slice %arg1[%arg0, %c0_i32_0, %c0_i32_1] : memref<2x4x256xf32, #tpu.memory_space<any>> -> memref<1x4x256xf32, #tpu.memory_space<any>>
    %1 = tpu.memref_squeeze %0 : memref<1x4x256xf32, #tpu.memory_space<any>> -> memref<4x256xf32, #tpu.memory_space<any>>
    %c0_i32_2 = arith.constant 0 : i32
    %c0_i32_3 = arith.constant 0 : i32
    %2 = tpu.memref_slice %arg5[%c0_i32_2, %c0_i32_3] : memref<4x256xf32, #tpu.memory_space<vmem>> -> memref<4x256xf32, #tpu.memory_space<vmem>>
    %3 = tpu.memref_slice %arg6[%c0_i32] : memref<1x!tpu.dma_semaphore, #tpu.memory_space<semaphore_mem>> -> memref<1x!tpu.dma_semaphore, #tpu.memory_space<semaphore_mem>>
    %4 = tpu.memref_squeeze %3 : memref<1x!tpu.dma_semaphore, #tpu.memory_space<semaphore_mem>> -> memref<!tpu.dma_semaphore, #tpu.memory_space<semaphore_mem>>
    tpu.enqueue_dma source(%1 : memref<4x256xf32, #tpu.memory_space<any>>) target(%2 : memref<4x256xf32, #tpu.memory_space<vmem>>) target_semaphore(%4 : memref<!tpu.dma_semaphore, #tpu.memory_space<semaphore_mem>>)
    %cst = arith.constant 0.000000e+00 : f32
    %5 = vector.broadcast %cst : f32 to vector<4x1xf32>
    %c0_i32_4 = arith.constant 0 : i32
    %c0_i32_5 = arith.constant 0 : i32
    %c0_i32_6 = arith.constant 0 : i32
    %6 = tpu.memref_slice %arg1[%arg0, %c0_i32_5, %c0_i32_6] : memref<2x4x256xf32, #tpu.memory_space<any>> -> memref<1x4x256xf32, #tpu.memory_space<any>>
    %7 = tpu.memref_squeeze %6 : memref<1x4x256xf32, #tpu.memory_space<any>> -> memref<4x256xf32, #tpu.memory_space<any>>
    %c0_i32_7 = arith.constant 0 : i32
    %c0_i32_8 = arith.constant 0 : i32
    %8 = tpu.memref_slice %arg5[%c0_i32_7, %c0_i32_8] : memref<4x256xf32, #tpu.memory_space<vmem>> -> memref<4x256xf32, #tpu.memory_space<vmem>>
    %9 = tpu.memref_slice %arg6[%c0_i32_4] : memref<1x!tpu.dma_semaphore, #tpu.memory_space<semaphore_mem>> -> memref<1x!tpu.dma_semaphore, #tpu.memory_space<semaphore_mem>>
    %10 = tpu.memref_squeeze %9 : memref<1x!tpu.dma_semaphore, #tpu.memory_space<semaphore_mem>> -> memref<!tpu.dma_semaphore, #tpu.memory_space<semaphore_mem>>
    tpu.wait_dma2 semaphore(%10 : memref<!tpu.dma_semaphore, #tpu.memory_space<semaphore_mem>>) src(%7 : memref<4x256xf32, #tpu.memory_space<any>>) dst(%8 : memref<4x256xf32, #tpu.memory_space<vmem>>)
    %c0 = arith.constant 0 : index
    %c0_9 = arith.constant 0 : index
    %11 = vector.load %arg5[%c0, %c0_9] : memref<4x256xf32, #tpu.memory_space<vmem>>, vector<4x256xf32>
    %cst_10 = arith.constant dense<0.000000e+00> : vector<4xf32>
    %12 = vector.multi_reduction <add>, %11, %cst_10 [1] : vector<4x256xf32> to vector<4xf32>
    %13 = vector.shape_cast %12 : vector<4xf32> to vector<4x1xf32>
    %14 = arith.addf %5, %13 : vector<4x1xf32>
    %cst_11 = arith.constant 3.906250e-03 : f32
    %15 = vector.broadcast %cst_11 : f32 to vector<4x1xf32>
    %16 = arith.mulf %14, %15 : vector<4x1xf32>
    %17 = tpu.transpose %16, [1, 0] : vector<4x1xf32> -> vector<1x4xf32>
    %c0_12 = arith.constant 0 : index
    %c0_13 = arith.constant 0 : index
    %18 = vector.load %arg2[%c0_12, %c0_13] : memref<4x4xf32, #tpu.memory_space<vmem>>, vector<4x4xf32>
    %19 = vector.broadcast %17 : vector<1x4xf32> to vector<4x4xf32>
    %20 = arith.mulf %18, %19 : vector<4x4xf32>
    %cst_14 = arith.constant dense<0.000000e+00> : vector<4xf32>
    %21 = vector.multi_reduction <add>, %20, %cst_14 [1] : vector<4x4xf32> to vector<4xf32>
    %22 = vector.shape_cast %21 : vector<4xf32> to vector<4x1xf32>
    %c0_15 = arith.constant 0 : index
    %c0_16 = arith.constant 0 : index
    %23 = vector.load %arg3[%c0_15, %c0_16] : memref<4x1xf32, #tpu.memory_space<vmem>>, vector<4x1xf32>
    %24 = arith.addf %22, %23 : vector<4x1xf32>
    %cst_17 = arith.constant 3.000000e+00 : f32
    %25 = vector.broadcast %cst_17 : f32 to vector<4x1xf32>
    %26 = arith.addf %24, %25 : vector<4x1xf32>
    %cst_18 = arith.constant 0.166666672 : f32
    %27 = vector.broadcast %cst_18 : f32 to vector<4x1xf32>
    %28 = arith.mulf %26, %27 : vector<4x1xf32>
    %cst_19 = arith.constant 0.000000e+00 : f32
    %cst_20 = arith.constant 1.000000e+00 : f32
    %29 = vector.broadcast %cst_19 : f32 to vector<4x1xf32>
    %30 = arith.maximumf %29, %28 : vector<4x1xf32>
    %31 = vector.broadcast %cst_20 : f32 to vector<4x1xf32>
    %32 = arith.minimumf %31, %30 : vector<4x1xf32>
    %c0_21 = arith.constant 0 : index
    %c0_22 = arith.constant 0 : index
    %33 = vector.load %arg5[%c0_21, %c0_22] : memref<4x256xf32, #tpu.memory_space<vmem>>, vector<4x256xf32>
    %34 = vector.broadcast %32 : vector<4x1xf32> to vector<4x256xf32>
    %35 = arith.mulf %33, %34 : vector<4x256xf32>
    %c0_23 = arith.constant 0 : index
    %c0_24 = arith.constant 0 : index
    %36 = vector.load %arg5[%c0_23, %c0_24] : memref<4x256xf32, #tpu.memory_space<vmem>>, vector<4x256xf32>
    tpu.vector_store %arg5[%c0_23, %c0_24], %35 {strides = array<i32>} : memref<4x256xf32, #tpu.memory_space<vmem>>, vector<4x256xf32>,
    %c0_i32_25 = arith.constant 0 : i32
    %c0_i32_26 = arith.constant 0 : i32
    %c0_i32_27 = arith.constant 0 : i32
    %37 = tpu.memref_slice %arg5[%c0_i32_26, %c0_i32_27] : memref<4x256xf32, #tpu.memory_space<vmem>> -> memref<4x256xf32, #tpu.memory_space<vmem>>
    %c0_i32_28 = arith.constant 0 : i32
    %c0_i32_29 = arith.constant 0 : i32
    %38 = tpu.memref_slice %arg4[%arg0, %c0_i32_28, %c0_i32_29] : memref<2x4x256xf32, #tpu.memory_space<any>> -> memref<1x4x256xf32, #tpu.memory_space<any>>
    %39 = tpu.memref_squeeze %38 : memref<1x4x256xf32, #tpu.memory_space<any>> -> memref<4x256xf32, #tpu.memory_space<any>>
    %40 = tpu.memref_slice %arg7[%c0_i32_25] : memref<1x!tpu.dma_semaphore, #tpu.memory_space<semaphore_mem>> -> memref<1x!tpu.dma_semaphore, #tpu.memory_space<semaphore_mem>>
    %41 = tpu.memref_squeeze %40 : memref<1x!tpu.dma_semaphore, #tpu.memory_space<semaphore_mem>> -> memref<!tpu.dma_semaphore, #tpu.memory_space<semaphore_mem>>
    tpu.enqueue_dma source(%37 : memref<4x256xf32, #tpu.memory_space<vmem>>) target(%39 : memref<4x256xf32, #tpu.memory_space<any>>) target_semaphore(%41 : memref<!tpu.dma_semaphore, #tpu.memory_space<semaphore_mem>>)
    %c0_i32_30 = arith.constant 0 : i32
    %c0_i32_31 = arith.constant 0 : i32
    %c0_i32_32 = arith.constant 0 : i32
    %42 = tpu.memref_slice %arg5[%c0_i32_31, %c0_i32_32] : memref<4x256xf32, #tpu.memory_space<vmem>> -> memref<4x256xf32, #tpu.memory_space<vmem>>
    %c0_i32_33 = arith.constant 0 : i32
    %c0_i32_34 = arith.constant 0 : i32
    %43 = tpu.memref_slice %arg4[%arg0, %c0_i32_33, %c0_i32_34] : memref<2x4x256xf32, #tpu.memory_space<any>> -> memref<1x4x256xf32, #tpu.memory_space<any>>
    %44 = tpu.memref_squeeze %43 : memref<1x4x256xf32, #tpu.memory_space<any>> -> memref<4x256xf32, #tpu.memory_space<any>>
    %45 = tpu.memref_slice %arg7[%c0_i32_30] : memref<1x!tpu.dma_semaphore, #tpu.memory_space<semaphore_mem>> -> memref<1x!tpu.dma_semaphore, #tpu.memory_space<semaphore_mem>>
    %46 = tpu.memref_squeeze %45 : memref<1x!tpu.dma_semaphore, #tpu.memory_space<semaphore_mem>> -> memref<!tpu.dma_semaphore, #tpu.memory_space<semaphore_mem>>
    tpu.wait_dma2 semaphore(%46 : memref<!tpu.dma_semaphore, #tpu.memory_space<semaphore_mem>>) src(%42 : memref<4x256xf32, #tpu.memory_space<vmem>>) dst(%44 : memref<4x256xf32, #tpu.memory_space<any>>)
    return
  }
  func.func @transform_1(%arg0: i32) -> (i32, i32) {
    %c0_i32 = arith.constant 0 : i32
    %c0_i32_0 = arith.constant 0 : i32
    %c0_i32_1 = arith.constant 0 : i32
    return %c0_i32, %c0_i32_0 : i32, i32
  }
  func.func @transform_2(%arg0: i32) -> (i32, i32) {
    %c0_i32 = arith.constant 0 : i32
    %c0_i32_0 = arith.constant 0 : i32
    %c0_i32_1 = arith.constant 0 : i32
    return %c0_i32, %c0_i32_0 : i32, i32
  }
}

</mosaic_0001>

<llo_original>
// kernel: tpu_custom_call.1
$region0: #{tpu_custom_call.1}
  #allocation0 [shape = 'u32[]', space=smem, size = 0x4, offset = 0x4, fixed_abs, tag = 'smem constant byte address 0x4 - core index']
  #allocation1 [shape = 'u32[72,128]{1,0:T(1,128)}', space=vmem, size = 0x9000, scoped, tag = 'internal scratch']
  #allocation2 [shape = 'f32[4,256]{1,0:T(4,128)}', space=vmem, size = 0x1000, scoped, tag = 'scratch operand']
  #allocation3 [shape = 's32[1]{0}', space=sflag, size = 0x4, scoped, tag = 'scratch operand']
  #allocation4 [shape = 's32[1]{0}', space=sflag, size = 0x4, scoped, tag = 'scratch operand']
  #allocation5 [shape = 's32[]', space=sflag, size = 0x4, offset = 0, fixed_abs, tag = 'sflag constant byte address 0x0 - dummy sync flag']
  #allocation6 [shape = 's32[]', space=sflag, size = 0x4, offset = 0, fixed_abs, tag = 'sflag constant byte address 0x0 - dummy sync flag']
  #allocation7 [shape = 'u32[]', space=smem, size = 0x4, offset = 0x44, fixed_abs, tag = 'smem constant byte address 0x44 - assertion arg 0']
  #allocation8 [shape = 'u32[]', space=smem, size = 0x4, offset = 0x48, fixed_abs, tag = 'smem constant byte address 0x48 - assertion arg 1']
  #allocation9 [shape = 's32[]', space=sflag, size = 0x4, offset = 0, fixed_abs, tag = 'sflag constant byte address 0x0 - dummy sync flag']
  #allocation10 [shape = 's32[]', space=sflag, size = 0x4, offset = 0, fixed_abs, tag = 'sflag constant byte address 0x0 - dummy sync flag']
  %s0 = inlined_call_operand.hbm [shape: f32[2,4,256], index: 0, kind: input, shape index: {}, may-alias: {0,3}]
  %s1 = inlined_call_operand.vmem [shape: f32[4,4], index: 1, kind: input, shape index: {}]
  %s2 = inlined_call_operand.vmem [shape: f32[4,1], index: 2, kind: input, shape index: {}]
  %s3 = inlined_call_operand.hbm [shape: f32[2,4,256], index: 3, kind: output, shape index: {}, may-alias: {0,3}]
  %s4 = sld [smem:[#allocation0]]
  $region37: #{tpu_custom_call.1} parent=0
    _
  %s6 = ssub.s32 1, %s4
  %s7 = scalar_select 0, %s6, %s4
  loop: start=0, step=1, limit=3
  $region2: #{tpu_custom_call.1} parent=0 // loop_pre_header
    _
  $region3: #{tpu_custom_call.1} parent=0 // loop_header
    %s9 = sphi 0, %s13
    %p10 = scmp.ge.s32.totalorder %s9, 3
    %s16 = sphi 0, %s16
    %s18 = sphi 0, %s16
    %s26 = sphi 0, %s18
    %s30 = sphi 0, %s30
    %s32 = sphi 0, %s30
    %s40 = sphi 0, %s32
  $region4: #{tpu_custom_call.1} parent=0 // loop_header_branch
    %12 = sbr.rel (%p10) target = $region8
  $region5: #{tpu_custom_call.1} parent=0 // loop_body
    %s14 = ssub.s32 %s9, 1
    %s15 = sadd.s32 %s9, 1
    %s17 = sadd.s32 %s16, 1
    %p19 = scmp.eq.s32.totalorder %s9, 1
    %p20 = scmp.ne.s32.totalorder %s16, %s18
    %p21 = scmp.eq.s32.totalorder %s9, 0
    %p22 = por %p20, %p21
    %p23 = scmp.ne.s32.totalorder %s16, %s18
    %p24 = scmp.eq.s32.totalorder %s14, 1
    %p25 = por %p23, %p24
    %p27 = scmp.ne.s32.totalorder %s18, %s26
    %p28 = scmp.eq.s32.totalorder %s14, 0
    %p29 = por %p27, %p28
    %s31 = sadd.s32 %s30, 1
    %p33 = scmp.eq.s32.totalorder %s9, 1
    %p34 = scmp.ne.s32.totalorder %s30, %s32
    %p35 = scmp.eq.s32.totalorder %s9, 0
    %p36 = por %p34, %p35
    %p37 = scmp.ne.s32.totalorder %s30, %s32
    %p38 = scmp.eq.s32.totalorder %s14, 1
    %p39 = por %p37, %p38
    %p41 = scmp.ne.s32.totalorder %s32, %s40
    %p42 = scmp.eq.s32.totalorder %s14, 0
    %p43 = por %p41, %p42
    %p44 = scmp.le.s32.totalorder 1, %s9
    // Predicated region
    $region9: #{tpu_custom_call.1} parent=5 // pred_check
      %p45 = pneg %p44
    $region10: #{tpu_custom_call.1} parent=5 // pred_check_branch
      %47 = sbr.rel (%p45) target = $region12
    $region11: #{tpu_custom_call.1} parent=5 // pred_region
      %s48 = ssub.s32 %s9, 1
      // Predicated region
      $region13: #{tpu_custom_call.1} parent=11 // pred_check
        %p49 = pneg %p29
      $region14: #{tpu_custom_call.1} parent=11 // pred_check_branch
        %51 = sbr.rel (%p49) target = $region16
      $region15: #{tpu_custom_call.1} parent=11 // pred_region
        _
      $region16: #{tpu_custom_call.1} parent=11 // pred_fallthru
        _
      // Predicated region
      $region17: #{tpu_custom_call.1} parent=11 // pred_check
        %p52 = pneg %p43
      $region18: #{tpu_custom_call.1} parent=11 // pred_check_branch
        %54 = sbr.rel (%p52) target = $region20
      $region19: #{tpu_custom_call.1} parent=11 // pred_region
        _
      $region20: #{tpu_custom_call.1} parent=11 // pred_fallthru
        _
    $region12: #{tpu_custom_call.1} parent=5 // pred_fallthru
      _
    %p55 = scmp.lt.s32.totalorder %s9, 2
    // Predicated region
    $region21: #{tpu_custom_call.1} parent=5 // pred_check
      %p56 = pneg %p55
    $region22: #{tpu_custom_call.1} parent=5 // pred_check_branch
      %58 = sbr.rel (%p56) target = $region24
    $region23: #{tpu_custom_call.1} parent=5 // pred_region
      _
    $region24: #{tpu_custom_call.1} parent=5 // pred_fallthru
      _
    %p59 = scmp.le.s32.totalorder 1, %s9
    // Predicated region
    $region25: #{tpu_custom_call.1} parent=5 // pred_check
      %p60 = pneg %p59
    $region26: #{tpu_custom_call.1} parent=5 // pred_check_branch
      %62 = sbr.rel (%p60) target = $region28
    $region27: #{tpu_custom_call.1} parent=5 // pred_region
      %s63 = ssub.s32 %s9, 1
      %p64 = pneg %p29
      %p65 = pneg %p25
      %p66 = pneg %p43
      %p67 = pneg %p39
      %s68 = smul.u32 %s14, 2
      %s69 = smul.addr %s68, 4
      %s70 = scalar_lea.hbm %s0, %s69
      // Predicated region
      $region29: #{tpu_custom_call.1} parent=27 // pred_check
        _
      $region30: #{tpu_custom_call.1} parent=27 // pred_check_branch
        %72 = sbr.rel target = $region32
      $region31: #{tpu_custom_call.1} parent=27 // pred_region
        %73 = sst [smem:[#allocation7]] [#allocation6]
        %74 = sst [smem:[#allocation8]] [#allocation5]
      $region32: #{tpu_custom_call.1} parent=27 // pred_fallthru
        _
      %76 = shalt.err (0)
      %s78 = sshll.u32 %s70, 4
      %s79 = int_to_ptr.hbm [resolvable:$true] %s78
      %s80 = sshll.u32 [#allocation2], 4
      %s81 = int_to_ptr.vmem [resolvable:$true] %s80
      %83 = dma.hbm_to_vmem [thread:$0]  %s79, 128, %s81, [#allocation3]
      %s84 = smul.u32 4, 1
      %s85 = smul.u32 %s84, 2
      %s86 = sshll.u32 %s85, 4
      %87 = dma.done [#allocation3], %s86
      %v88 = vld [vmem:[#allocation2] sm:$0xff]
      %90 = vst [vmem:[#allocation1] ss:$2 sm:$0xff] %v88
      %v91 = vld.sshfl [vmem:[#allocation1] sm:$0xff pattern:$0x75316420]
      %v92 = vld.sshfl [vmem:[#allocation1 + $0x8] sm:$0xff pattern:$0x75316420]
      %vm95 = vcmask 1043456
      %v96 = vsel %vm95, %v91, 0.0
      %v97 = vsel %vm95, %v92, 0.0
      %v98 = vadd.f32 %v96, %v97
      %99 = vadd.xlane.f32.xlu0 %v98
      %v100 = vpop.xlane.xlu0 %99
      %v101 = vadd.f32 %v100, 0.0
      %v102 = vmul.f32 %v101, 0.00390625
      %103 = vxpose.xlu0.b32.start [1/16] %v102, 128
      %104 = vxpose.xlu0.b32.cont [2/16] 0.0, 128
      %105 = vxpose.xlu0.b32.cont [3/16] 0.0, 128
      %106 = vxpose.xlu0.b32.cont [4/16] 0.0, 128
      %107 = vxpose.xlu0.b32.cont [5/16] 0.0, 128
      %108 = vxpose.xlu0.b32.cont [6/16] 0.0, 128
      %109 = vxpose.xlu0.b32.cont [7/16] 0.0, 128
      %110 = vxpose.xlu0.b32.cont [8/16] 0.0, 128
      %111 = vxpose.xlu0.b32.cont [9/16] 0.0, 128
      %112 = vxpose.xlu0.b32.cont [10/16] 0.0, 128
      %113 = vxpose.xlu0.b32.cont [11/16] 0.0, 128
      %114 = vxpose.xlu0.b32.cont [12/16] 0.0, 128
      %115 = vxpose.xlu0.b32.cont [13/16] 0.0, 128
      %116 = vxpose.xlu0.b32.cont [14/16] 0.0, 128
      %117 = vxpose.xlu0.b32.cont [15/16] 0.0, 128
      %118 = vxpose.xlu0.b32.end [16/16] 0.0, 128
      %v119 = vpop.trf.xlu0
      %v120 = vpop.trf.xlu0
      %v121 = vpop.trf.xlu0
      %v122 = vpop.trf.xlu0
      %v123 = vpop.trf.xlu0
      %v124 = vpop.trf.xlu0
      %v125 = vpop.trf.xlu0
      %v126 = vpop.trf.xlu0
      %v127 = vpop.trf.xlu0
      %v128 = vpop.trf.xlu0
      %v129 = vpop.trf.xlu0
      %v130 = vpop.trf.xlu0
      %v131 = vpop.trf.xlu0
      %v132 = vpop.trf.xlu0
      %v133 = vpop.trf.xlu0
      %v134 = vpop.trf.xlu0
      %v135 = vld [vmem:[%s1] sm:$0xf]
      %v136 = vperm.slane %v119, 0
      %v137 = vmul.f32 %v135, %v136
      %vm138 = vcmask 27648
      %v139 = vsel %vm138, %v137, 0.0
      %140 = vadd.xlane.f32.xlu0 %v139
      %v141 = vpop.xlane.xlu0 %140
      %v142 = vld [vmem:[%s2] sm:$0xf]
      %v143 = vadd.f32 %v141, %v142
      %v144 = vadd.f32 %v143, 3.0
      %v145 = vmul.f32 %v144, 0.16666667
      %v146 = vmax.f32 %v145, 0.0
      %v147 = vmin.f32 %v146, 1.0
      %149 = vset.pattern.permute.xlu0 0
      %150 = vperm.xlu0 %149, %v147
      %v151 = vpop.permute.xlu0 %150
      %v153 = vunpack.c.l.s4 839922192
      %v154 = vunpack.c.0.s8 %v153
      %v155 = vperm.slane %v151, %v154
      %v157 = vmul.f32 %v88, %v155
      %158 = vst [vmem:[#allocation2] sm:$0xff] %v157
      %s159 = smul.addr %s68, 4
      %s160 = scalar_lea.hbm %s3, %s159
      // Predicated region
      $region33: #{tpu_custom_call.1} parent=27 // pred_check
        _
      $region34: #{tpu_custom_call.1} parent=27 // pred_check_branch
        %162 = sbr.rel target = $region36
      $region35: #{tpu_custom_call.1} parent=27 // pred_region
        %163 = sst [smem:[#allocation7]] [#allocation10]
        %164 = sst [smem:[#allocation8]] [#allocation9]
      $region36: #{tpu_custom_call.1} parent=27 // pred_fallthru
        _
      %166 = shalt.err (0)
      %s168 = sshll.u32 [#allocation2], 4
      %s169 = int_to_ptr.vmem [resolvable:$true] %s168
      %s170 = sshll.u32 %s160, 4
      %s171 = int_to_ptr.hbm [resolvable:$true] %s170
      %173 = dma.vmem_to_hbm [thread:$0]  %s169, 128, %s171, [#allocation4]
      %s174 = sshll.u32 %s85, 4
      %175 = dma.done [#allocation4], %s174
    $region28: #{tpu_custom_call.1} parent=5 // pred_fallthru
      _
  $region6: #{tpu_custom_call.1} parent=0 // loop_footer
    %s13 = sadd.s32 1, %s9
  $region7: #{tpu_custom_call.1} parent=0 // loop_footer_branch
    %8 = sbr.rel target = $region3
  $region8: #{tpu_custom_call.1} parent=0 // loop_exit
    _
  %176 = vsyncmov [#allocation3]
  %s177 = vpop.sfrf %176
  %p178 = scmp.eq.s32.totalorder %s177, 0
  %p179 = pneg %p178
  %181 = shalt.err (%p179)
  %182 = vsyncmov [#allocation4]
  %s183 = vpop.sfrf %182
  %p184 = scmp.eq.s32.totalorder %s183, 0
  %p185 = pneg %p184
  %187 = shalt.err (%p185)

</llo_original>
